<compile_context>
chip_gen: v7x
topology: tpu7x:2x2x1
jax: 0.10.0
libtpu: 0.0.40
codegen_flags: <defaults>
</compile_context>

<pallas_src>
import functools

import jax
import jax.numpy as jnp
from jax import lax
from jax.experimental import pallas as pl
from jax.experimental.pallas import tpu as pltpu

# ---------------- problem sizes (small, consistent with the module) ----------
B = 2            # batch
S = 8            # sequence length (must be >= num_classes + 1)
H = 32           # hidden size
NUM_CLASSES = 4  # C
LANE = 128       # lane-dense width for the predicts store


# ---------------------------- Pallas kernel ----------------------------------
def dual_lm_kernel(hid_ref, pred_ref, *, num_classes):
    # hid_ref : (bb, S, H) block in VMEM (full sequence block; rows C+1..S-1
    #           are simply never read — static ref slices are free views)
    # pred_ref: (bb, LANE) lane-dense f32 output slab; first C lanes hold
    #           the predicts, remaining lanes are 0.
    c = num_classes

    cls_feats = hid_ref[:, 0:1, :]          # (bb, 1, H)  keepdim: no reshape
    label_feats = hid_ref[:, 1:c + 1, :]    # (bb, C, H)

    # einsum('bd,bcd->bc'): VPU broadcast-mul in the native dtype (bf16 runs
    # natively on v6e/v7x) + lane-axis reduce with f32 accumulation.
    pred = jnp.sum(cls_feats * label_feats, axis=-1, keepdims=True,
                   dtype=jnp.float32)                              # (bb, C, 1)

    # Lane-dense store: project the C per-class sums onto the first C of 128
    # lanes with a one-hot (VPU mul + sublane reduce); remaining lanes are 0.
    # The (bb, C, 128) temp is bounded because the wrapper caps bb at 64.
    lane_idx = lax.broadcasted_iota(jnp.int32, (c, LANE), 1)
    cls_idx = lax.broadcasted_iota(jnp.int32, (c, LANE), 0)
    onehot = (lane_idx == cls_idx).astype(jnp.float32)             # (C, LANE)
    pred_wide = jnp.sum(pred * onehot[None, :, :], axis=1)         # (bb, LANE)

    pred_ref[...] = pred_wide


# ---------------------------- tiling policy -----------------------------------
def _pick_batch_tile(b):
    """Return (bb, b_pad): per-step batch tile and padded batch size."""
    if b <= 8:
        # Single full-array tile; (bb, S, H) / (bb, 128) blocks equal the full
        # array dims so the (8,128) rule is satisfied without padding.
        return b, b
    # Multiple of 8 for full-sublane packing (unmasked vst), capped at 64 to
    # bound the one-hot scatter temp; ceil(b/2) rounded up gives >= 2
    # "parallel" grid steps so v7x's 2 TensorCores both get work (on v5e/v6e
    # the serial grid steps are cheap at ~0.35 us each).
    bb = min(64, ((pl.cdiv(b, 2) + 7) // 8) * 8)
    b_pad = pl.cdiv(b, bb) * bb
    return bb, b_pad


# ------------------------------- wrapper --------------------------------------
def dual_lm_forward(hiddens, num_classes=NUM_CLASSES):
    """hiddens: (B, S, H) — the base model's last_hidden_state."""
    b, s, h = hiddens.shape
    assert s >= num_classes + 1

    bb, b_pad = _pick_batch_tile(b)
    hid_in = hiddens
    if b_pad != b:
        # Pad batch so every block is a full (bb, S, H) / (bb, 128) block —
        # no partial boundary blocks, always-unmasked stores.
        hid_in = jnp.pad(hiddens, ((0, b_pad - b), (0, 0), (0, 0)))

    grid = (b_pad // bb,)

    pred_wide = pl.pallas_call(
        functools.partial(dual_lm_kernel, num_classes=num_classes),
        out_shape=jax.ShapeDtypeStruct((b_pad, LANE), jnp.float32),
        grid_spec=pltpu.PrefetchScalarGridSpec(
            num_scalar_prefetch=0,
            grid=grid,
            in_specs=[pl.BlockSpec((bb, s, h), lambda i: (i, 0, 0))],
            out_specs=pl.BlockSpec((bb, LANE), lambda i: (i, 0)),
        ),
        compiler_params=pltpu.CompilerParams(
            dimension_semantics=("parallel",)),
    )(hid_in)

    # Slice the lane-dense f32 slab back to (B, C); cast to the module's
    # dtype in the wrapper (no-op for f32 inputs) so the kernel itself always
    # writes back the f32 accumulation.
    predicts = pred_wide[:b, :num_classes].astype(hiddens.dtype)

    return {
        "predicts": predicts,                            # (B, C)
        # Pure views of the hidden states — returned from the wrapper instead
        # of being copied back out of the kernel.
        "cls_feats": hiddens[:, 0, :],                   # (B, H)
        "label_feats": hiddens[:, 1:num_classes + 1, :], # (B, C, H)
    }


# ---------------------------------- main --------------------------------------
if __name__ == "__main__":
    key = jax.random.PRNGKey(0)
    k_hid, k_w, k_b = jax.random.split(key, 3)

    # Synthetic "base_model" output (last_hidden_state).
    hiddens = jax.random.normal(k_hid, (B, S, H), dtype=jnp.float32)

    # Deterministic init of the module's Linear(hidden_size, num_classes).
    # TODO(synk): self.linear / self.dropout are never applied in
    # DualLM.forward, so they are initialized here but intentionally unused.
    bound = 1.0 / jnp.sqrt(H)
    _linear_w = jax.random.uniform(k_w, (NUM_CLASSES, H), minval=-bound, maxval=bound)
    _linear_b = jax.random.uniform(k_b, (NUM_CLASSES,), minval=-bound, maxval=bound)

    outputs = dual_lm_forward(hiddens)
    jax.block_until_ready(outputs)

    # Reference check in plain JAX.
    cls_ref = hiddens[:, 0, :]
    lab_ref = hiddens[:, 1:NUM_CLASSES + 1, :]
    pred_ref = jnp.einsum("bd,bcd->bc", cls_ref, lab_ref)

    assert outputs["predicts"].shape == (B, NUM_CLASSES)
    assert outputs["cls_feats"].shape == (B, H)
    assert outputs["label_feats"].shape == (B, NUM_CLASSES, H)
    assert jnp.allclose(outputs["predicts"], pred_ref, atol=1e-5, rtol=1e-5)
    assert jnp.allclose(outputs["cls_feats"], cls_ref)
    assert jnp.allclose(outputs["label_feats"], lab_ref)

    print("KERNEL_OK")
</pallas_src>

<mosaic_0001>
module attributes {stable_mosaic.version = 11 : i64} {
  func.func @dual_lm_kernel(%arg0: i32, %arg1: memref<2x8x32xf32, #tpu.memory_space<vmem>>, %arg2: memref<2x128xf32, #tpu.memory_space<vmem>>) attributes {dimension_semantics = [#tpu.dimension_semantics<parallel>], iteration_bounds = array<i64: 1>, scalar_prefetch = 0 : i64, scratch_operands = 0 : i64, tpu.core_type = #tpu.core_type<tc>, window_params = [{transform_indices = @transform_0, window_bounds = array<i64: 2, 8, 32>}, {transform_indices = @transform_1, window_bounds = array<i64: 2, 128>}]} {
    %c0 = arith.constant 0 : index
    %c0_0 = arith.constant 0 : index
    %c0_1 = arith.constant 0 : index
    %0 = vector.load %arg1[%c0, %c0_0, %c0_1] : memref<2x8x32xf32, #tpu.memory_space<vmem>>, vector<2x1x32xf32>
    %c0_2 = arith.constant 0 : index
    %c1 = arith.constant 1 : index
    %c0_3 = arith.constant 0 : index
    %1 = vector.load %arg1[%c0_2, %c1, %c0_3] : memref<2x8x32xf32, #tpu.memory_space<vmem>>, vector<2x4x32xf32>
    %2 = vector.broadcast %0 : vector<2x1x32xf32> to vector<2x4x32xf32>
    %3 = arith.mulf %2, %1 : vector<2x4x32xf32>
    %cst = arith.constant dense<0.000000e+00> : vector<2x4xf32>
    %4 = vector.multi_reduction <add>, %3, %cst [2] : vector<2x4x32xf32> to vector<2x4xf32>
    %5 = vector.shape_cast %4 : vector<2x4xf32> to vector<2x4x1xf32>
    %6 = tpu.iota {dimensions = array<i32: 1>} : vector<4x128xi32>
    %7 = tpu.iota {dimensions = array<i32: 0>} : vector<4x128xi32>
    %8 = arith.cmpi eq, %6, %7 : vector<4x128xi32>
    %9 = arith.extui %8 : vector<4x128xi1> to vector<4x128xi32>
    %10 = arith.sitofp %9 : vector<4x128xi32> to vector<4x128xf32>
    %11 = vector.shape_cast %10 : vector<4x128xf32> to vector<1x4x128xf32>
    %12 = vector.broadcast %5 : vector<2x4x1xf32> to vector<2x4x128xf32>
    %13 = vector.broadcast %11 : vector<1x4x128xf32> to vector<2x4x128xf32>
    %14 = arith.mulf %12, %13 : vector<2x4x128xf32>
    %cst_4 = arith.constant dense<0.000000e+00> : vector<2x128xf32>
    %15 = vector.multi_reduction <add>, %14, %cst_4 [1] : vector<2x4x128xf32> to vector<2x128xf32>
    %c0_5 = arith.constant 0 : index
    %c0_6 = arith.constant 0 : index
    %16 = vector.load %arg2[%c0_5, %c0_6] : memref<2x128xf32, #tpu.memory_space<vmem>>, vector<2x128xf32>
    tpu.vector_store %arg2[%c0_5, %c0_6], %15 {strides = array<i32>} : memref<2x128xf32, #tpu.memory_space<vmem>>, vector<2x128xf32>,
    return
  }
  func.func @transform_0(%arg0: i32) -> (i32, i32, i32) {
    %c0_i32 = arith.constant 0 : i32
    %c0_i32_0 = arith.constant 0 : i32
    %c0_i32_1 = arith.constant 0 : i32
    return %arg0, %c0_i32, %c0_i32_0 : i32, i32, i32
  }
  func.func @transform_1(%arg0: i32) -> (i32, i32) {
    %c0_i32 = arith.constant 0 : i32
    %c0_i32_0 = arith.constant 0 : i32
    return %arg0, %c0_i32 : i32, i32
  }
}

</mosaic_0001>

<llo_original>
// kernel: tpu_custom_call.1
$region0: #{tpu_custom_call.1}
  #allocation0 [shape = 'u32[]', space=smem, size = 0x4, offset = 0x4, fixed_abs, tag = 'smem constant byte address 0x4 - core index']
  #allocation1 [shape = 'u32[144,128]{1,0:T(1,128)}', space=vmem, size = 0x12000, scoped, tag = 'internal scratch']
  %s0 = inlined_call_operand.hbm [shape: f32[2,8,32], index: 0, kind: input, shape index: {}]
  %s1 = inlined_call_operand.hbm [shape: f32[2,128], index: 1, kind: output, shape index: {}]
  %s2 = sld [smem:[#allocation0]]
  $region18: #{tpu_custom_call.1} parent=0
    _
  %s4 = ssub.s32 1, %s2
  %s5 = scalar_select 0, %s4, %s2
  $region1: #{tpu_custom_call.1} parent=0
    #allocation2 [shape = 'u8[8192]{0}', space=vmem, size = 0x2000, scoped, tag = 'input window, operand 0, single buffered']
    #allocation3 [shape = 's32[1]{0}', space=sflag, size = 0x4, scoped, tag = 'scoped memory for tpu_custom_call.1']
    #allocation4 [shape = 's32[1]{0}', space=sflag, size = 0x4, scoped, tag = 'scoped memory for tpu_custom_call.1']
    #allocation5 [shape = 'u8[1024]{0}', space=vmem, size = 0x400, scoped, tag = 'output window, operand 0, single buffered']
    %6 = vsyncpa [#allocation3], 0
    %7 = vsyncpa [#allocation4], 0
    // Predicated region
    $region2: #{tpu_custom_call.1} parent=1 // pred_check
      _
    $region3: #{tpu_custom_call.1} parent=1 // pred_check_branch
      %9 = sbr.rel (0) target = $region5
    $region4: #{tpu_custom_call.1} parent=1 // pred_region
      %s11 = ssub.s32 256, 256
      %12 = vsyncadd [#allocation3], %s11
      %s13 = sshll.u32 [#allocation2], 4
      %s14 = int_to_ptr.vmem [resolvable:$true] %s13
      %19 = dma.hbm_to_vmem [thread:$0]  %s0, 256, %s14, [#allocation3], 128, 128, 8
    $region5: #{tpu_custom_call.1} parent=1 // pred_fallthru
      _
    // Predicated region
    $region6: #{tpu_custom_call.1} parent=1 // pred_check
      _
    $region7: #{tpu_custom_call.1} parent=1 // pred_check_branch
      %21 = sbr.rel (0) target = $region9
    $region8: #{tpu_custom_call.1} parent=1 // pred_region
      %22 = dma.done [#allocation3], 256
    $region9: #{tpu_custom_call.1} parent=1 // pred_fallthru
      _
    %v23 = vld [vmem:[#allocation2] sm:$0x1]
    %v24 = vld [vmem:[#allocation2 + $0x8] sm:$0x1]
    %v25 = vld [vmem:[#allocation2 + $0x1] sm:$0xf]
    %v26 = vld [vmem:[#allocation2 + $0x9] sm:$0xf]
    %v27 = vlaneseq
    %v28 = vshrl.u32 %v27, 7
    %v29 = vsub.s32 0, %v28
    %v30 = vrot.slane %v23, %v29
    %v31 = vlaneseq
    %v32 = vshrl.u32 %v31, 7
    %v33 = vsub.s32 0, %v32
    %v34 = vrot.slane %v24, %v33
    %v35 = vmul.f32 %v30, %v25
    %v36 = vmul.f32 %v34, %v26
    %vm37 = vcmask 257024
    %v38 = vsel %vm37, %v35, 0.0
    %39 = vadd.xlane.f32.xlu0 %v38
    %v40 = vpop.xlane.xlu0 %39
    %v41 = vsel %vm37, %v36, 0.0
    %42 = vadd.xlane.f32.xlu0 %v41
    %v43 = vpop.xlane.xlu0 %42
    %v44 = vlaneseq
    %v45 = vand.u32 %v44, 127
    %v46 = vlaneseq
    %v47 = vshrl.u32 %v46, 7
    %vm48 = vcmp.eq.s32.totalorder %v45, %v47
    %v49 = vsel %vm48, 1, 0
    %v50 = vcvt.s32.f32 %v49
    %v51 = vmul.f32 %v40, %v50
    %v52 = vmul.f32 %v43, %v50
    %vm53 = vcmask 1043456
    %v54 = vsel %vm53, %v51, 0.0
    %v55 = vrot.slane %v54, 4
    %v56 = vadd.f32 %v54, %v55
    %v57 = vrot.slane %v56, 2
    %v58 = vadd.f32 %v56, %v57
    %v59 = vrot.slane %v58, 1
    %v60 = vadd.f32 %v58, %v59
    %v61 = vsel %vm53, %v52, 0.0
    %v62 = vrot.slane %v61, 4
    %v63 = vadd.f32 %v61, %v62
    %v64 = vrot.slane %v63, 2
    %v65 = vadd.f32 %v63, %v64
    %v66 = vrot.slane %v65, 1
    %v67 = vadd.f32 %v65, %v66
    %vm70 = vcmask 1041409
    %v71 = vsel %vm70, %v67, %v60
    %73 = vst [vmem:[#allocation5] sm:$0x3] %v71
    // Predicated region
    $region10: #{tpu_custom_call.1} parent=1 // pred_check
      _
    $region11: #{tpu_custom_call.1} parent=1 // pred_check_branch
      %75 = sbr.rel (0) target = $region13
    $region12: #{tpu_custom_call.1} parent=1 // pred_region
      %s77 = ssub.s32 32, 32
      %78 = vsyncadd [#allocation4], %s77
      %s80 = sshll.u32 [#allocation5], 4
      %s81 = int_to_ptr.vmem [resolvable:$true] %s80
      %83 = dma.vmem_to_hbm [thread:$0]  %s81, 32, %s1, [#allocation4]
    $region13: #{tpu_custom_call.1} parent=1 // pred_fallthru
      _
    // Predicated region
    $region14: #{tpu_custom_call.1} parent=1 // pred_check
      _
    $region15: #{tpu_custom_call.1} parent=1 // pred_check_branch
      %85 = sbr.rel (0) target = $region17
    $region16: #{tpu_custom_call.1} parent=1 // pred_region
      %86 = dma.done [#allocation4], 32
    $region17: #{tpu_custom_call.1} parent=1 // pred_fallthru
      _
    %87 = vsyncpa [#allocation3], 1
    %88 = vsyncpa [#allocation4], 1

</llo_original>
